<compile_context>
chip_gen: v6e
topology: v6e:2x2x1
jax: 0.10.0
libtpu: 0.0.40
codegen_flags: <defaults>
</compile_context>

<pallas_src>
import jax
import jax.numpy as jnp
from jax.experimental import pallas as pl
from jax.experimental.pallas import tpu as pltpu


_TB_MAX = 16384          # lanes per batch tile (multiple of 128); ~2 MiB/tile
_SMALL_BATCH = 4096      # below this, plain XLA beats kernel-launch overhead


def _round_up(n, m):
    return ((n + m - 1) // m) * m


def _linear_kernel(w_ref, b_ref, x_ref, o_ref):
    """w_ref: SMEM (OUT*IN,) f32, b_ref: SMEM (OUT,) f32,
    x_ref: VMEM (IN, TB), o_ref: VMEM (OUT, TB).

    Pure-VPU unrolled scalar-x-vector FMAs over K = IN (tiny); bias folded
    into the accumulator init. Batch sits on the 128-wide lane axis, so
    interior tiles use dense unmasked vector stores.
    """
    x = x_ref[...].astype(jnp.float32)      # (IN, TB), accumulate in f32
    in_dim = x.shape[0]                     # static (== IN)
    out_dim = o_ref.shape[0]                # static (== OUT)

    for o in range(out_dim):                # OUT = 2, unrolled
        acc = b_ref[o] + w_ref[o * in_dim] * x[0:1, :]       # (1, TB)
        for k in range(1, in_dim):          # IN = 3, unrolled
            acc = acc + w_ref[o * in_dim + k] * x[k:k + 1, :]
        o_ref[o:o + 1, :] = acc


def linear_forward_lane_dense(x_t, w, b):
    """Lane-dense linear: x_t [IN, B] -> y_t [OUT, B] (f32).

    Preferred entry point when the surrounding graph can produce/consume the
    transposed layouts directly (avoids two full-HBM relayout passes).
    """
    IN, B = x_t.shape
    OUT = w.shape[0]

    # Big tiles to amortize per-grid-step overhead, but keep >= 2 tiles when
    # B allows so the "parallel" axis can shard across v7x's 2 TensorCores.
    TB = min(_TB_MAX, max(128, _round_up(pl.cdiv(B, 2), 128)))
    num_tiles = pl.cdiv(B, TB)

    # No explicit padding: Pallas clips the ragged last tile's writeback;
    # its out-of-bounds input lanes only feed discarded output lanes.
    return pl.pallas_call(
        _linear_kernel,
        out_shape=jax.ShapeDtypeStruct((OUT, B), jnp.float32),
        grid=(num_tiles,),
        in_specs=[
            pl.BlockSpec(memory_space=pltpu.MemorySpace.SMEM),   # w (flat)
            pl.BlockSpec(memory_space=pltpu.MemorySpace.SMEM),   # b
            pl.BlockSpec((IN, TB), lambda i: (0, i)),            # x tile
        ],
        out_specs=pl.BlockSpec((OUT, TB), lambda i: (0, i)),
        compiler_params=pltpu.CompilerParams(
            dimension_semantics=("parallel",),   # batch axis -> v7x dual TCs
        ),
    )(
        w.reshape(-1).astype(jnp.float32),
        b.reshape(-1).astype(jnp.float32),
        x_t,
    )


def linear_forward(x, w, b, *, force_pallas=False):
    """x: [B, IN] -> y: [B, OUT] f32 (PyTorch nn.Linear semantics)."""
    B, _ = x.shape
    if B < _SMALL_BATCH and not force_pallas:
        # Small-batch fast path: launch + relayout overhead dwarfs the math.
        return (x.astype(jnp.float32) @ w.T + b[None, :]).astype(jnp.float32)

    # Keep bf16 inputs as bf16 (halves the dominant HBM stream on v6e/v7x);
    # the kernel accumulates in f32. Everything else is read as f32.
    if x.dtype != jnp.bfloat16:
        x = x.astype(jnp.float32)
    y_t = linear_forward_lane_dense(x.T, w, b)   # relayouts live only here
    return y_t.T


class NeuralNetworkPallas:
    """JAX/Pallas equivalent of the PyTorch NeuralNetwork module."""

    def __init__(self, input_size=3, output_size=2):
        # Deterministic parameters, exactly as set in the PyTorch __init__.
        self.w = jnp.array([[0.1, 0.2, 0.3],
                            [0.4, 0.5, 0.6]], dtype=jnp.float32)   # [out, in]
        assert self.w.shape == (output_size, input_size)
        self.b = jnp.array([0.1, 0.2], dtype=jnp.float32)          # [out]

    def __call__(self, x, *, force_pallas=False):
        return linear_forward(x, self.w, self.b, force_pallas=force_pallas)


if __name__ == "__main__":
    key = jax.random.PRNGKey(0)
    model = NeuralNetworkPallas(input_size=3, output_size=2)

    # 1) Small batch matching the tiny module -> plain-XLA fast path.
    x_small = jax.random.normal(key, (8, 3), dtype=jnp.float32)
    y_small = jax.block_until_ready(model(x_small))
    ref_small = x_small @ model.w.T + model.b[None, :]
    assert y_small.shape == (8, 2)
    assert jnp.allclose(y_small, ref_small, atol=1e-5, rtol=1e-5)

    # 2) Exercise the Pallas kernel itself, including a ragged (non-128-
    #    aligned, non-tile-aligned) batch tail and the 2-tile grid.
    x_big = jax.random.normal(key, (300, 3), dtype=jnp.float32)
    y_big = jax.block_until_ready(model(x_big, force_pallas=True))
    ref_big = x_big @ model.w.T + model.b[None, :]
    assert y_big.shape == (300, 2)
    assert jnp.allclose(y_big, ref_big, atol=1e-5, rtol=1e-5)

    print("KERNEL_OK")
</pallas_src>

<mosaic_0001>
module attributes {stable_mosaic.version = 11 : i64} {
  func.func @_linear_kernel(%arg0: i32, %arg1: memref<6xf32, #tpu.memory_space<smem>>, %arg2: memref<2xf32, #tpu.memory_space<smem>>, %arg3: memref<3x256xf32, #tpu.memory_space<vmem>>, %arg4: memref<2x256xf32, #tpu.memory_space<vmem>>) attributes {dimension_semantics = [#tpu.dimension_semantics<parallel>], iteration_bounds = array<i64: 2>, scalar_prefetch = 0 : i64, scratch_operands = 0 : i64, tpu.core_type = #tpu.core_type<tc>, window_params = [{transform_indices = @transform_0, window_bounds = array<i64: 6>}, {transform_indices = @transform_1, window_bounds = array<i64: 2>}, {transform_indices = @transform_2, window_bounds = array<i64: 3, 256>}, {transform_indices = @transform_3, window_bounds = array<i64: 2, 256>}]} {
    %c0 = arith.constant 0 : index
    %c0_0 = arith.constant 0 : index
    %0 = vector.load %arg3[%c0, %c0_0] : memref<3x256xf32, #tpu.memory_space<vmem>>, vector<3x256xf32>
    %c0_1 = arith.constant 0 : index
    %1 = memref.load %arg2[%c0_1] : memref<2xf32, #tpu.memory_space<smem>>
    %c0_2 = arith.constant 0 : index
    %2 = memref.load %arg1[%c0_2] : memref<6xf32, #tpu.memory_space<smem>>
    %3 = vector.extract_strided_slice %0 {offsets = [0, 0], sizes = [1, 256], strides = [1, 1]} : vector<3x256xf32> to vector<1x256xf32>
    %4 = vector.broadcast %2 : f32 to vector<1x256xf32>
    %5 = arith.mulf %4, %3 : vector<1x256xf32>
    %6 = vector.broadcast %1 : f32 to vector<1x256xf32>
    %7 = arith.addf %6, %5 : vector<1x256xf32>
    %c1 = arith.constant 1 : index
    %8 = memref.load %arg1[%c1] : memref<6xf32, #tpu.memory_space<smem>>
    %9 = vector.extract_strided_slice %0 {offsets = [1, 0], sizes = [1, 256], strides = [1, 1]} : vector<3x256xf32> to vector<1x256xf32>
    %10 = vector.broadcast %8 : f32 to vector<1x256xf32>
    %11 = arith.mulf %10, %9 : vector<1x256xf32>
    %12 = arith.addf %7, %11 : vector<1x256xf32>
    %c2 = arith.constant 2 : index
    %13 = memref.load %arg1[%c2] : memref<6xf32, #tpu.memory_space<smem>>
    %14 = vector.extract_strided_slice %0 {offsets = [2, 0], sizes = [1, 256], strides = [1, 1]} : vector<3x256xf32> to vector<1x256xf32>
    %15 = vector.broadcast %13 : f32 to vector<1x256xf32>
    %16 = arith.mulf %15, %14 : vector<1x256xf32>
    %17 = arith.addf %12, %16 : vector<1x256xf32>
    %c0_3 = arith.constant 0 : index
    %c0_4 = arith.constant 0 : index
    %18 = vector.load %arg4[%c0_3, %c0_4] : memref<2x256xf32, #tpu.memory_space<vmem>>, vector<1x256xf32>
    tpu.vector_store %arg4[%c0_3, %c0_4], %17 {strides = array<i32>} : memref<2x256xf32, #tpu.memory_space<vmem>>, vector<1x256xf32>,
    %c1_5 = arith.constant 1 : index
    %19 = memref.load %arg2[%c1_5] : memref<2xf32, #tpu.memory_space<smem>>
    %c3 = arith.constant 3 : index
    %20 = memref.load %arg1[%c3] : memref<6xf32, #tpu.memory_space<smem>>
    %21 = vector.extract_strided_slice %0 {offsets = [0, 0], sizes = [1, 256], strides = [1, 1]} : vector<3x256xf32> to vector<1x256xf32>
    %22 = vector.broadcast %20 : f32 to vector<1x256xf32>
    %23 = arith.mulf %22, %21 : vector<1x256xf32>
    %24 = vector.broadcast %19 : f32 to vector<1x256xf32>
    %25 = arith.addf %24, %23 : vector<1x256xf32>
    %c4 = arith.constant 4 : index
    %26 = memref.load %arg1[%c4] : memref<6xf32, #tpu.memory_space<smem>>
    %27 = vector.extract_strided_slice %0 {offsets = [1, 0], sizes = [1, 256], strides = [1, 1]} : vector<3x256xf32> to vector<1x256xf32>
    %28 = vector.broadcast %26 : f32 to vector<1x256xf32>
    %29 = arith.mulf %28, %27 : vector<1x256xf32>
    %30 = arith.addf %25, %29 : vector<1x256xf32>
    %c5 = arith.constant 5 : index
    %31 = memref.load %arg1[%c5] : memref<6xf32, #tpu.memory_space<smem>>
    %32 = vector.extract_strided_slice %0 {offsets = [2, 0], sizes = [1, 256], strides = [1, 1]} : vector<3x256xf32> to vector<1x256xf32>
    %33 = vector.broadcast %31 : f32 to vector<1x256xf32>
    %34 = arith.mulf %33, %32 : vector<1x256xf32>
    %35 = arith.addf %30, %34 : vector<1x256xf32>
    %c1_6 = arith.constant 1 : index
    %c0_7 = arith.constant 0 : index
    %36 = vector.load %arg4[%c1_6, %c0_7] : memref<2x256xf32, #tpu.memory_space<vmem>>, vector<1x256xf32>
    tpu.vector_store %arg4[%c1_6, %c0_7], %35 {strides = array<i32>} : memref<2x256xf32, #tpu.memory_space<vmem>>, vector<1x256xf32>,
    return
  }
  func.func @transform_0(%arg0: i32) -> i32 {
    %c0_i32 = arith.constant 0 : i32
    %c0_i32_0 = arith.constant 0 : i32
    return %c0_i32 : i32
  }
  func.func @transform_1(%arg0: i32) -> i32 {
    %c0_i32 = arith.constant 0 : i32
    %c0_i32_0 = arith.constant 0 : i32
    return %c0_i32 : i32
  }
  func.func @transform_2(%arg0: i32) -> (i32, i32) {
    %c0_i32 = arith.constant 0 : i32
    %c0_i32_0 = arith.constant 0 : i32
    return %c0_i32, %arg0 : i32, i32
  }
  func.func @transform_3(%arg0: i32) -> (i32, i32) {
    %c0_i32 = arith.constant 0 : i32
    %c0_i32_0 = arith.constant 0 : i32
    return %c0_i32, %arg0 : i32, i32
  }
}

</mosaic_0001>

<llo_original>
// kernel: tpu_custom_call.1
$region0: #{tpu_custom_call.1}
  #allocation0 [shape = 'u32[]', space=smem, size = 0x4, offset = 0x4, fixed_abs, tag = 'smem constant byte address 0x4 - core index']
  #allocation1 [shape = 'u32[144,128]{1,0:T(1,128)}', space=vmem, size = 0x12000, scoped, tag = 'internal scratch']
  %s0 = inlined_call_operand.hbm [shape: f32[6], index: 0, kind: input, shape index: {}]
  %s1 = inlined_call_operand.vmem [shape: f32[2], index: 1, kind: input, shape index: {}]
  %s2 = inlined_call_operand.hbm [shape: f32[3,300], index: 2, kind: input, shape index: {}]
  %s3 = inlined_call_operand.hbm [shape: f32[2,300], index: 3, kind: output, shape index: {}]
  %s4 = sld [smem:[#allocation0]]
  $region57: #{tpu_custom_call.1} parent=0
    _
  %s6 = ssub.s32 1, %s4
  %s7 = scalar_select 0, %s6, %s4
  $region1: #{tpu_custom_call.1} parent=0
    #allocation2 [shape = 'u8[512]{0}', space=smem, size = 0x200, scoped, tag = 'input window, operand 0, single buffered']
    #allocation3 [shape = 's32[2]{0}', space=sflag, size = 0x8, scoped, tag = 'scoped memory for tpu_custom_call.1']
    #allocation4 [shape = 's32[2]{0}', space=sflag, size = 0x8, scoped, tag = 'scoped memory for tpu_custom_call.1']
    #allocation5 [shape = 's32[2]{0}', space=sflag, size = 0x8, scoped, tag = 'scoped memory for tpu_custom_call.1']
    #allocation6 [shape = 's32[2]{0}', space=sflag, size = 0x8, scoped, tag = 'scoped memory for tpu_custom_call.1']
    #allocation7 [shape = 'u8[512]{0}', space=smem, size = 0x200, scoped, tag = 'input window, operand 1, single buffered']
    #allocation8 [shape = 'u8[8192]{0}', space=vmem, size = 0x2000, scoped, tag = 'input window, operand 2']
    #allocation9 [shape = 'u8[4096]{0}', space=vmem, size = 0x1000, scoped, tag = 'output window, operand 0']
    %8 = vsyncpa [#allocation5], 0
    %9 = vsyncpa [#allocation6], 0
    %10 = vsyncpa [#allocation3], 0
    %s11 = scalar_lea.sflag [#allocation3], 1
    %12 = vsyncpa %s11, 0
    %13 = vsyncpa [#allocation4], 0
    %s14 = scalar_lea.sflag [#allocation4], 1
    %15 = vsyncpa %s14, 0
    loop: start=0, step=1, limit=4
    $region2: #{tpu_custom_call.1} parent=1 // loop_pre_header
      _
    $region3: #{tpu_custom_call.1} parent=1 // loop_header
      %s17 = sphi 0, %s21
      %p18 = scmp.ge.s32.totalorder %s17, 4
      %s25 = sphi 0, %s25
      %s27 = sphi 0, %s25
      %s28 = sphi 0, %s27
      %s42 = sphi 0, %s28
      %s46 = sphi 0, %s46
      %s48 = sphi 0, %s46
      %s49 = sphi 0, %s48
      %s63 = sphi 0, %s49
      %s69 = sphi 0, %s71
      %s72 = sphi 0, %s69
      %s73 = sphi 0, %s72
      %s89 = sphi 0, %s73
      %s95 = sphi 0, %s97
      %s98 = sphi 0, %s95
      %s99 = sphi 0, %s98
      %s115 = sphi 0, %s99
    $region4: #{tpu_custom_call.1} parent=1 // loop_header_branch
      %20 = sbr.rel (%p18) target = $region8
    $region5: #{tpu_custom_call.1} parent=1 // loop_body
      %s22 = ssub.s32 %s17, 1
      %s23 = ssub.s32 %s17, 2
      %s24 = sadd.s32 %s17, 1
      %s26 = sadd.s32 %s25, 1
      %p29 = scmp.eq.s32.totalorder %s17, 1
      %p30 = scmp.ne.s32.totalorder %s25, %s27
      %p31 = scmp.eq.s32.totalorder %s17, 0
      %p32 = por %p30, %p31
      %p33 = scmp.ne.s32.totalorder %s25, %s27
      %p34 = scmp.eq.s32.totalorder %s22, 1
      %p35 = por %p33, %p34
      %p36 = scmp.ne.s32.totalorder %s27, %s28
      %p37 = scmp.eq.s32.totalorder %s22, 0
      %p38 = por %p36, %p37
      %p39 = scmp.ne.s32.totalorder %s27, %s28
      %p40 = scmp.eq.s32.totalorder %s23, 1
      %p41 = por %p39, %p40
      %p43 = scmp.ne.s32.totalorder %s28, %s42
      %p44 = scmp.eq.s32.totalorder %s23, 0
      %p45 = por %p43, %p44
      %s47 = sadd.s32 %s46, 1
      %p50 = scmp.eq.s32.totalorder %s17, 1
      %p51 = scmp.ne.s32.totalorder %s46, %s48
      %p52 = scmp.eq.s32.totalorder %s17, 0
      %p53 = por %p51, %p52
      %p54 = scmp.ne.s32.totalorder %s46, %s48
      %p55 = scmp.eq.s32.totalorder %s22, 1
      %p56 = por %p54, %p55
      %p57 = scmp.ne.s32.totalorder %s48, %s49
      %p58 = scmp.eq.s32.totalorder %s22, 0
      %p59 = por %p57, %p58
      %p60 = scmp.ne.s32.totalorder %s48, %s49
      %p61 = scmp.eq.s32.totalorder %s23, 1
      %p62 = por %p60, %p61
      %p64 = scmp.ne.s32.totalorder %s49, %s63
      %p65 = scmp.eq.s32.totalorder %s23, 0
      %p66 = por %p64, %p65
      %s67 = ssub.s32 %s17, %s24
      %p68 = scmp.eq.s32.totalorder %s67, 0
      %s70 = sadd.s32 %s69, 1
      %s71 = scalar_select %p68, %s69, %s70
      %p74 = pneg %p68
      %p75 = scmp.eq.s32.totalorder %s17, 1
      %p76 = por %p74, %p75
      %p77 = scmp.ne.s32.totalorder %s69, %s72
      %p78 = scmp.eq.s32.totalorder %s17, 0
      %p79 = por %p77, %p78
      %p80 = scmp.ne.s32.totalorder %s69, %s72
      %p81 = scmp.eq.s32.totalorder %s22, 1
      %p82 = por %p80, %p81
      %p83 = scmp.ne.s32.totalorder %s72, %s73
      %p84 = scmp.eq.s32.totalorder %s22, 0
      %p85 = por %p83, %p84
      %p86 = scmp.ne.s32.totalorder %s72, %s73
      %p87 = scmp.eq.s32.totalorder %s23, 1
      %p88 = por %p86, %p87
      %p90 = scmp.ne.s32.totalorder %s73, %s89
      %p91 = scmp.eq.s32.totalorder %s23, 0
      %p92 = por %p90, %p91
      %s93 = ssub.s32 %s17, %s24
      %p94 = scmp.eq.s32.totalorder %s93, 0
      %s96 = sadd.s32 %s95, 1
      %s97 = scalar_select %p94, %s95, %s96
      %p100 = pneg %p94
      %p101 = scmp.eq.s32.totalorder %s17, 1
      %p102 = por %p100, %p101
      %p103 = scmp.ne.s32.totalorder %s95, %s98
      %p104 = scmp.eq.s32.totalorder %s17, 0
      %p105 = por %p103, %p104
      %p106 = scmp.ne.s32.totalorder %s95, %s98
      %p107 = scmp.eq.s32.totalorder %s22, 1
      %p108 = por %p106, %p107
      %p109 = scmp.ne.s32.totalorder %s98, %s99
      %p110 = scmp.eq.s32.totalorder %s22, 0
      %p111 = por %p109, %p110
      %p112 = scmp.ne.s32.totalorder %s98, %s99
      %p113 = scmp.eq.s32.totalorder %s23, 1
      %p114 = por %p112, %p113
      %p116 = scmp.ne.s32.totalorder %s99, %s115
      %p117 = scmp.eq.s32.totalorder %s23, 0
      %p118 = por %p116, %p117
      %p119 = scmp.le.s32.totalorder 1, %s17
      %p120 = scmp.lt.s32.totalorder %s17, 3
      %p121 = pnand %p119, %p120
      %p122 = pneg %p121
      // Predicated region
      $region9: #{tpu_custom_call.1} parent=5 // pred_check
        _
      $region10: #{tpu_custom_call.1} parent=5 // pred_check_branch
        %124 = sbr.rel (%p121) target = $region12
      $region11: #{tpu_custom_call.1} parent=5 // pred_region
        %s125 = ssub.s32 %s17, 1
        // Predicated region
        $region13: #{tpu_custom_call.1} parent=11 // pred_check
          %p126 = pneg %p38
        $region14: #{tpu_custom_call.1} parent=11 // pred_check_branch
          %128 = sbr.rel (%p126) target = $region16
        $region15: #{tpu_custom_call.1} parent=11 // pred_region
          %s130 = ssub.s32 16, 16
          %131 = vsyncadd [#allocation5], %s130
          %134 = dma.hbm_to_smem %s0, 16, [#allocation2], [#allocation5]
        $region16: #{tpu_custom_call.1} parent=11 // pred_fallthru
          _
        // Predicated region
        $region17: #{tpu_custom_call.1} parent=11 // pred_check
          %p135 = pneg %p59
        $region18: #{tpu_custom_call.1} parent=11 // pred_check_branch
          %137 = sbr.rel (%p135) target = $region20
        $region19: #{tpu_custom_call.1} parent=11 // pred_region
          %s139 = ssub.s32 16, 16
          %140 = vsyncadd [#allocation6], %s139
          %s142 = sshll.u32 %s1, 4
          %s143 = int_to_ptr.vmem [resolvable:$true] %s142
          %145 = dma.vmem_to_smem %s143, 16, [#allocation7], [#allocation6]
        $region20: #{tpu_custom_call.1} parent=11 // pred_fallthru
          _
      $region12: #{tpu_custom_call.1} parent=5 // pred_fallthru
        _
      %p146 = scmp.lt.s32.totalorder %s17, 2
      // Predicated region
      $region21: #{tpu_custom_call.1} parent=5 // pred_check
        %p147 = pneg %p146
      $region22: #{tpu_custom_call.1} parent=5 // pred_check_branch
        %149 = sbr.rel (%p147) target = $region24
      $region23: #{tpu_custom_call.1} parent=5 // pred_region
        // Predicated region
        $region25: #{tpu_custom_call.1} parent=23 // pred_check
          %p150 = pneg %p79
        $region26: #{tpu_custom_call.1} parent=23 // pred_check_branch
          %152 = sbr.rel (%p150) target = $region28
        $region27: #{tpu_custom_call.1} parent=23 // pred_region
          %s153 = sand.u32 %s69, 1
          %s154 = scalar_lea.sflag [#allocation3], %s153
          %s155 = sand.u32 %s69, 1
          %s156 = smul.addr %s155, 8
          %s157 = scalar_lea.vmem [#allocation8], %s156
          %s158 = smul.u32 2, %s17
          %s159 = ssub.s32 3, %s158
          %p160 = scmp.lt.s32.totalorder %s159, 2
          %s161 = scalar_select %p160, %s159, 2
          %s162 = smul.u32 64, %s161
          %s164 = ssub.s32 128, %s162
          %165 = vsyncadd %s154, %s164
          %p166 = scmp.ne.s32.totalorder 0, %s162
          %s167 = smul.addr %s158, 64
          %s168 = scalar_lea.hbm %s2, %s167
          %s169 = smul.u32 %s161, 4
          %s170 = sshll.u32 %s169, 4
          %s171 = sshll.u32 %s157, 4
          %s172 = int_to_ptr.vmem [resolvable:$true] %s171
          %174 = dma.hbm_to_vmem [thread:$0]  (%p166), %s168, %s170, %s172, %s154
        $region28: #{tpu_custom_call.1} parent=23 // pred_fallthru
          _
      $region24: #{tpu_custom_call.1} parent=5 // pred_fallthru
        _
      %p175 = scmp.le.s32.totalorder 1, %s17
      %p176 = scmp.lt.s32.totalorder %s17, 3
      %p177 = pnand %p175, %p176
      %p178 = pneg %p177
      // Predicated region
      $region29: #{tpu_custom_call.1} parent=5 // pred_check
        _
      $region30: #{tpu_custom_call.1} parent=5 // pred_check_branch
        %180 = sbr.rel (%p177) target = $region32
      $region31: #{tpu_custom_call.1} parent=5 // pred_region
        %s181 = ssub.s32 %s17, 1
        // Predicated region
        $region33: #{tpu_custom_call.1} parent=31 // pred_check
          %p182 = pneg %p38
        $region34: #{tpu_custom_call.1} parent=31 // pred_check_branch
          %184 = sbr.rel (%p182) target = $region36
        $region35: #{tpu_custom_call.1} parent=31 // pred_region
          %185 = dma.done [#allocation5], 16
        $region36: #{tpu_custom_call.1} parent=31 // pred_fallthru
          _
        // Predicated region
        $region37: #{tpu_custom_call.1} parent=31 // pred_check
          %p186 = pneg %p59
        $region38: #{tpu_custom_call.1} parent=31 // pred_check_branch
          %188 = sbr.rel (%p186) target = $region40
        $region39: #{tpu_custom_call.1} parent=31 // pred_region
          %189 = dma.done [#allocation6], 16
        $region40: #{tpu_custom_call.1} parent=31 // pred_fallthru
          _
        %s190 = sand.u32 %s72, 1
        %s191 = scalar_lea.sflag [#allocation3], %s190
        %s192 = sand.u32 %s72, 1
        %s193 = smul.addr %s192, 8
        %s194 = scalar_lea.vmem [#allocation8], %s193
        // Predicated region
        $region41: #{tpu_custom_call.1} parent=31 // pred_check
          %p195 = pneg %p85
        $region42: #{tpu_custom_call.1} parent=31 // pred_check_branch
          %197 = sbr.rel (%p195) target = $region44
        $region43: #{tpu_custom_call.1} parent=31 // pred_region
          %198 = dma.done %s191, 128
        $region44: #{tpu_custom_call.1} parent=31 // pred_fallthru
          _
        %199 = sfence
        %p200 = pneg %p38
        %p201 = pneg %p35
        %p202 = pneg %p59
        %p203 = pneg %p56
        %s204 = sand.u32 %s72, 1
        %s205 = scalar_lea.sflag [#allocation3], %s204
        %s206 = sand.u32 %s72, 1
        %s207 = smul.addr %s206, 8
        %s208 = scalar_lea.vmem [#allocation8], %s207
        %p209 = pneg %p85
        %p210 = pneg %p82
        %p211 = pneg %p111
        %p212 = pneg %p108
        %s213 = sand.u32 %s98, 1
        %s214 = scalar_lea.sflag [#allocation4], %s213
        %s215 = sand.u32 %s98, 1
        %s216 = smul.addr %s215, 4
        %s217 = scalar_lea.vmem [#allocation9], %s216
        %s218 = smul.u32 2, %s22
        %s219 = ssub.s32 3, %s218
        %p220 = scmp.lt.s32.totalorder %s219, 2
        %s221 = scalar_select %p220, %s219, 2
        %s222 = smul.u32 64, %s221
        %s223 = smul.u32 2, %s22
        %s224 = ssub.s32 3, %s223
        %p225 = scmp.lt.s32.totalorder %s224, 2
        %s226 = scalar_select %p225, %s224, 2
        %s227 = smul.u32 32, %s226
        %v228 = vld [vmem:[%s194] sm:$0x77]
        %s229 = sld [smem:[#allocation7]]
        %s230 = sld [smem:[#allocation2]]
        %v231 = vstv %s230
        %v232 = vmul.f32 %v231, %v228
        %v233 = vstv %s229
        %v234 = vadd.f32 %v233, %v232
        %s235 = sld [smem:[#allocation2 + $0x1]]
        %v236 = vstv %s235
        %v237 = vmul.f32 %v236, %v228
        %v239 = vrot.slane %v237, 5
        %v240 = vrot.slane %v239, 4
        %v242 = vadd.f32 %v234, %v240
        %s243 = sld [smem:[#allocation2 + $0x2]]
        %v244 = vstv %s243
        %v245 = vmul.f32 %v244, %v228
        %v247 = vrot.slane %v245, 6
        %v248 = vrot.slane %v247, 4
        %v250 = vadd.f32 %v242, %v248
        %v253 = vunpack.c.l.s4 1966171168
        %v254 = vunpack.c.0.s8 %v253
        %v255 = vlaneseq
        %v256 = vshrl.u32 %v255, 7
        %v257 = vsub.s32 %v254, %v256
        %v258 = vrot.slane %v250, %v257
        %v260 = vunpack.c.l.s4 1966171168
        %v261 = vunpack.c.0.s8 %v260
        %v262 = vlaneseq
        %v263 = vshrl.u32 %v262, 7
        %v264 = vsub.s32 %v261, %v263
        %v265 = vrot.slane %v258, %v264
        %v267 = vlaneseq
        %vm268 = vcmp.ge.s32.totalorder %v267, 0
        %vm269 = vcmp.lt.s32.totalorder %v267, 256
        %vm270 = vmand %vm268, %vm269
        %271 = vst.msk [vmem:[%s217] ss:$2 sm:$0x3] %vm270, %v265
        %s272 = sld [smem:[#allocation7 + $0x1]]
        %s273 = sld [smem:[#allocation2 + $0x3]]
        %v274 = vstv %s273
        %v275 = vmul.f32 %v274, %v228
        %v276 = vstv %s272
        %v277 = vadd.f32 %v276, %v275
        %s278 = sld [smem:[#allocation2 + $0x4]]
        %v279 = vstv %s278
        %v280 = vmul.f32 %v279, %v228
        %v282 = vrot.slane %v280, 5
        %v283 = vrot.slane %v282, 4
        %v285 = vadd.f32 %v277, %v283
        %s286 = sld [smem:[#allocation2 + $0x5]]
        %v287 = vstv %s286
        %v288 = vmul.f32 %v287, %v228
        %v290 = vrot.slane %v288, 6
        %v291 = vrot.slane %v290, 4
        %v293 = vadd.f32 %v285, %v291
        %v296 = vunpack.c.l.s4 1966171168
        %v297 = vunpack.c.0.s8 %v296
        %v298 = vlaneseq
        %v299 = vshrl.u32 %v298, 7
        %v300 = vsub.s32 %v297, %v299
        %v301 = vrot.slane %v293, %v300
        %v303 = vunpack.c.l.s4 1966171168
        %v304 = vunpack.c.0.s8 %v303
        %v305 = vlaneseq
        %v306 = vshrl.u32 %v305, 7
        %v307 = vsub.s32 %v304, %v306
        %v308 = vrot.slane %v301, %v307
        %s310 = scalar_lea.vmem %s217, 1 [#allocation9]
        %311 = vst.msk [vmem:[%s310] ss:$2 sm:$0x3] %vm270, %v308
        %s312 = sand.u32 %s98, 1
        %s313 = scalar_lea.sflag [#allocation4], %s312
        %s314 = sand.u32 %s98, 1
        %s315 = smul.addr %s314, 4
        %s316 = scalar_lea.vmem [#allocation9], %s315
        // Predicated region
        $region45: #{tpu_custom_call.1} parent=31 // pred_check
          %p317 = pneg %p108
        $region46: #{tpu_custom_call.1} parent=31 // pred_check_branch
          %319 = sbr.rel (%p317) target = $region48
        $region47: #{tpu_custom_call.1} parent=31 // pred_region
          %s320 = smul.u32 2, %s22
          %s321 = ssub.s32 3, %s320
          %p322 = scmp.lt.s32.totalorder %s321, 2
          %s323 = scalar_select %p322, %s321, 2
          %s324 = smul.u32 32, %s323
          %s326 = ssub.s32 64, %s324
          %327 = vsyncadd %s313, %s326
          %p328 = scmp.ne.s32.totalorder 0, %s324
          %s329 = smul.addr %s320, 32
          %s330 = scalar_lea.hbm %s3, %s329
          %s331 = smul.u32 %s323, 2
          %s332 = sshll.u32 %s331, 4
          %s333 = sshll.u32 %s316, 4
          %s334 = int_to_ptr.vmem [resolvable:$true] %s333
          %336 = dma.vmem_to_hbm [thread:$0]  (%p328), %s334, %s332, %s330, %s313
        $region48: #{tpu_custom_call.1} parent=31 // pred_fallthru
          _
      $region32: #{tpu_custom_call.1} parent=5 // pred_fallthru
        _
      %p337 = scmp.le.s32.totalorder 2, %s17
      // Predicated region
      $region49: #{tpu_custom_call.1} parent=5 // pred_check
        %p338 = pneg %p337
      $region50: #{tpu_custom_call.1} parent=5 // pred_check_branch
        %340 = sbr.rel (%p338) target = $region52
      $region51: #{tpu_custom_call.1} parent=5 // pred_region
        %s341 = ssub.s32 %s17, 2
        // Predicated region
        $region53: #{tpu_custom_call.1} parent=51 // pred_check
          %p342 = pneg %p114
        $region54: #{tpu_custom_call.1} parent=51 // pred_check_branch
          %344 = sbr.rel (%p342) target = $region56
        $region55: #{tpu_custom_call.1} parent=51 // pred_region
          %s345 = sand.u32 %s99, 1
          %s346 = scalar_lea.sflag [#allocation4], %s345
          %s347 = sand.u32 %s99, 1
          %s348 = smul.addr %s347, 4
          %s349 = scalar_lea.vmem [#allocation9], %s348
          %350 = dma.done %s346, 64
        $region56: #{tpu_custom_call.1} parent=51 // pred_fallthru
          _
      $region52: #{tpu_custom_call.1} parent=5 // pred_fallthru
        _
    $region6: #{tpu_custom_call.1} parent=1 // loop_footer
      %s21 = sadd.s32 1, %s17
    $region7: #{tpu_custom_call.1} parent=1 // loop_footer_branch
      %16 = sbr.rel target = $region3
    $region8: #{tpu_custom_call.1} parent=1 // loop_exit
      _
    %351 = vsyncpa [#allocation3], 1
    %s352 = scalar_lea.sflag [#allocation3], 1
    %353 = vsyncpa %s352, 1
    %354 = vsyncpa [#allocation4], 1
    %s355 = scalar_lea.sflag [#allocation4], 1
    %356 = vsyncpa %s355, 1
    %357 = vsyncpa [#allocation5], 1
    %s358 = scalar_lea.sflag [#allocation5], 1
    %359 = vsyncpa %s358, 1
    %360 = vsyncpa [#allocation6], 1
    %s361 = scalar_lea.sflag [#allocation6], 1
    %362 = vsyncpa %s361, 1

</llo_original>
